<compile_context>
chip_gen: v7x
topology: tpu7x:2x2x1
jax: 0.10.0
libtpu: 0.0.40
codegen_flags: <defaults>
</compile_context>

<pallas_src>
import jax
import jax.numpy as jnp
import numpy as np
from jax import lax
from jax.experimental import pallas as pl
from jax.experimental.pallas import tpu as pltpu

K_MODELS = 4
VAR_CLAMP = 1e-30

HIDDEN = 32   # inner Linear: in_features
OUT = 16      # inner Linear: out_features
BATCH = 2

SLAB_R = 128  # slab rows: 0..HIDDEN-1 = W^T, HIDDEN = bias, rest zero padding
SLAB_C = 128  # lane-dense columns (OUT padded to 128)
XPAD_R = 8    # BATCH padded to 8 sublanes

_SCALE = np.float32(np.sqrt(0.5))
_COV_SCALE = np.float32(np.sqrt(0.5) / np.sqrt(K_MODELS - 1.0))

_VMEM = pl.BlockSpec(memory_space=pltpu.MemorySpace.VMEM)


# --------------------------------------------------------------------------
# Fused kernel: update_parameters() x K  +  sample_parameters()  +  forward()
# --------------------------------------------------------------------------
def _swag_fused_kernel(params_ref, eps_ref, eps2_ref, x_ref, w_ref, y_ref):
    # ----- update_parameters(): statically unrolled over the K snapshots -----
    p = params_ref[0]
    mean = p                       # n_averaged == 0: copy params
    sq = p * p
    # torch's CovMatSqrt row 0 is the initial zeros((1, numel)) row; eps2[0]*0
    # contributes nothing, so only the K-1 deviation rows are accumulated, and
    # each deviation is folded into the covariance sample immediately.
    cov_acc = jnp.zeros_like(p)
    for k in range(1, K_MODELS):
        p = params_ref[k]
        c_old = np.float32(k / (k + 1.0))        # compile-time constants
        c_new = np.float32(1.0 / (k + 1.0))
        mean = mean * c_old + p * c_new
        sq = sq * c_old + (p * p) * c_new
        cov_acc = cov_acc + eps2_ref[k] * (p - mean)   # (SLAB_R,1) row coeffs

    # ----- sample_parameters() -----------------------------------------------
    var = jnp.maximum(sq - mean * mean, jnp.float32(VAR_CLAMP))
    w = mean + _SCALE * jnp.sqrt(var) * eps_ref[...] + _COV_SCALE * cov_acc
    w_ref[...] = w

    # ----- forward(): y = x @ W^T + b -----------------------------------------
    # x_ref carries a 1.0 in lane HIDDEN for the real batch rows, so the bias
    # row of the sampled slab is added by the same MXU contraction; exact-zero
    # lanes > HIDDEN mean the slab's padding noise never reaches y[:, :OUT].
    y_ref[...] = lax.dot_general(
        x_ref[...], w,
        dimension_numbers=(((1,), (0,)), ((), ())),
        preferred_element_type=jnp.float32)


def swag_update_sample_forward(param_slabs, eps_slab, eps2_rows, x_pad):
    return pl.pallas_call(
        _swag_fused_kernel,
        out_shape=(
            jax.ShapeDtypeStruct((SLAB_R, SLAB_C), jnp.float32),   # sampled slab
            jax.ShapeDtypeStruct((XPAD_R, SLAB_C), jnp.float32),   # y (padded)
        ),
        in_specs=[_VMEM, _VMEM, _VMEM, _VMEM],
        out_specs=(_VMEM, _VMEM),
    )(param_slabs, eps_slab, eps2_rows, x_pad)


# --------------------------------------------------------------------------
# Host glue: packing and the single jitted end-to-end pipeline (1 dispatch).
# --------------------------------------------------------------------------
def _pack_slab(weight, bias):
    """Transposed packing: rows 0..HIDDEN-1 hold W^T, row HIDDEN holds bias."""
    slab = jnp.zeros((SLAB_R, SLAB_C), jnp.float32)
    slab = slab.at[:HIDDEN, :OUT].set(weight.astype(jnp.float32).T)
    slab = slab.at[HIDDEN, :OUT].set(bias.astype(jnp.float32))
    return slab


@jax.jit
def swag_pipeline(param_slabs, eps_slab, eps2_w, eps2_b, x):
    # Per-row eps2: weight rows (< HIDDEN) use eps2_w[k], the bias row uses
    # eps2_b[k]; padding rows get 0.  Shape (K, SLAB_R, 1) so the kernel's
    # multiply broadcasts along lanes with no iota/select/scalar-broadcast.
    row_ids = jnp.arange(SLAB_R)[None, :]
    eps2_rows = jnp.where(
        row_ids < HIDDEN, eps2_w[:, None],
        jnp.where(row_ids == HIDDEN, eps2_b[:, None], 0.0),
    ).astype(jnp.float32)[..., None]

    # Lane-dense x with a 1.0 "bias lane" at column HIDDEN (real rows only).
    x_pad = jnp.zeros((XPAD_R, SLAB_C), jnp.float32)
    x_pad = x_pad.at[:BATCH, :HIDDEN].set(x.astype(jnp.float32))
    x_pad = x_pad.at[:BATCH, HIDDEN].set(1.0)

    w_slab, y_pad = swag_update_sample_forward(param_slabs, eps_slab,
                                               eps2_rows, x_pad)
    weight = w_slab[:HIDDEN, :OUT].T          # back to natural (OUT, HIDDEN)
    bias = w_slab[HIDDEN, :OUT]
    y = y_pad[:BATCH, :OUT]
    return weight, bias, y


# --------------------------------------------------------------------------
# Pure-JAX reference mirroring the PyTorch semantics (natural layouts).
# --------------------------------------------------------------------------
def ref_run(snapshots, eps_slab, eps2_w, eps2_b, x):
    scale = np.float32(np.sqrt(0.5))
    cov_scale = np.float32(np.sqrt(0.5) / np.sqrt(K_MODELS - 1.0))

    def run_param(plist, eps, eps2):
        mean = jnp.zeros_like(plist[0])
        sq = jnp.zeros_like(plist[0])
        cov = [jnp.zeros((plist[0].size,), jnp.float32)]   # torch zeros((1, numel))
        n = 0
        for p in plist:
            if n == 0:
                mean, sq = p, p * p
            else:
                mean = mean * n / (n + 1.0) + p / (n + 1.0)
                sq = sq * n / (n + 1.0) + p * p / (n + 1.0)
                cov.append((p - mean).reshape(-1))
                if len(cov) > K_MODELS:
                    cov = cov[1:]
            n += 1
        var = jnp.maximum(sq - mean * mean, VAR_CLAMP)
        cs = sum(eps2[r] * cov[r] for r in range(len(cov)))
        return mean + scale * jnp.sqrt(var) * eps + cov_scale * cs.reshape(mean.shape)

    # The kernel applies eps elementwise to the transposed slab, so the
    # reference uses the transposed view of the same draws.
    eps_w = eps_slab[:HIDDEN, :OUT].T
    eps_b = eps_slab[HIDDEN, :OUT]
    w = run_param([s["weight"] for s in snapshots], eps_w, eps2_w)
    b = run_param([s["bias"] for s in snapshots], eps_b, eps2_b)
    y = x @ w.T + b[None, :]
    return w, b, y


# --------------------------------------------------------------------------
if __name__ == "__main__":
    key = jax.random.PRNGKey(0)

    # Deterministic "training snapshots" of the inner Linear module.
    snapshots = []
    for _ in range(K_MODELS):
        key, kw, kb = jax.random.split(key, 3)
        snapshots.append({
            "weight": 0.1 * jax.random.normal(kw, (OUT, HIDDEN), jnp.float32),
            "bias": 0.1 * jax.random.normal(kb, (OUT,), jnp.float32),
        })
    param_slabs = jnp.stack([_pack_slab(s["weight"], s["bias"]) for s in snapshots])

    # Gaussian noise used by sample_parameters() (torch.randn_like / randn).
    key, k1, k2w, k2b, kx = jax.random.split(key, 5)
    eps_slab = jax.random.normal(k1, (SLAB_R, SLAB_C), jnp.float32)
    eps2_w = jax.random.normal(k2w, (K_MODELS,), jnp.float32)
    eps2_b = jax.random.normal(k2b, (K_MODELS,), jnp.float32)
    x = jax.random.normal(kx, (BATCH, HIDDEN), jnp.float32)

    weight, bias, y = jax.block_until_ready(
        swag_pipeline(param_slabs, eps_slab, eps2_w, eps2_b, x))

    ref_w, ref_b, ref_y = ref_run(snapshots, eps_slab, eps2_w, eps2_b, x)
    np.testing.assert_allclose(np.asarray(weight), np.asarray(ref_w),
                               rtol=1e-5, atol=1e-6)
    np.testing.assert_allclose(np.asarray(bias), np.asarray(ref_b),
                               rtol=1e-5, atol=1e-6)
    np.testing.assert_allclose(np.asarray(y), np.asarray(ref_y),
                               rtol=1e-5, atol=1e-5)

    print("KERNEL_OK")
</pallas_src>

<mosaic_0001>
module attributes {stable_mosaic.version = 11 : i64} {
  func.func @_swag_fused_kernel(%arg0: memref<4x128x128xf32, #tpu.memory_space<vmem>>, %arg1: memref<128x128xf32, #tpu.memory_space<vmem>>, %arg2: memref<4x128x1xf32, #tpu.memory_space<vmem>>, %arg3: memref<8x128xf32, #tpu.memory_space<vmem>>, %arg4: memref<128x128xf32, #tpu.memory_space<vmem>>, %arg5: memref<8x128xf32, #tpu.memory_space<vmem>>) attributes {dimension_semantics = [], scalar_prefetch = 0 : i64, scratch_operands = 0 : i64, tpu.core_type = #tpu.core_type<tc>} {
    %c0 = arith.constant 0 : index
    %c0_0 = arith.constant 0 : index
    %c0_1 = arith.constant 0 : index
    %0 = vector.load %arg0[%c0, %c0_0, %c0_1] : memref<4x128x128xf32, #tpu.memory_space<vmem>>, vector<1x128x128xf32>
    %1 = vector.shape_cast %0 : vector<1x128x128xf32> to vector<128x128xf32>
    %2 = arith.mulf %1, %1 : vector<128x128xf32>
    %cst = arith.constant 0.000000e+00 : f32
    %3 = vector.broadcast %cst : f32 to vector<128x128xf32>
    %c1 = arith.constant 1 : index
    %c0_2 = arith.constant 0 : index
    %c0_3 = arith.constant 0 : index
    %4 = vector.load %arg0[%c1, %c0_2, %c0_3] : memref<4x128x128xf32, #tpu.memory_space<vmem>>, vector<1x128x128xf32>
    %5 = vector.shape_cast %4 : vector<1x128x128xf32> to vector<128x128xf32>
    %cst_4 = arith.constant 5.000000e-01 : f32
    %6 = vector.broadcast %cst_4 : f32 to vector<128x128xf32>
    %7 = arith.mulf %1, %6 : vector<128x128xf32>
    %cst_5 = arith.constant 5.000000e-01 : f32
    %8 = vector.broadcast %cst_5 : f32 to vector<128x128xf32>
    %9 = arith.mulf %5, %8 : vector<128x128xf32>
    %10 = arith.addf %7, %9 : vector<128x128xf32>
    %cst_6 = arith.constant 5.000000e-01 : f32
    %11 = vector.broadcast %cst_6 : f32 to vector<128x128xf32>
    %12 = arith.mulf %2, %11 : vector<128x128xf32>
    %13 = arith.mulf %5, %5 : vector<128x128xf32>
    %cst_7 = arith.constant 5.000000e-01 : f32
    %14 = vector.broadcast %cst_7 : f32 to vector<128x128xf32>
    %15 = arith.mulf %13, %14 : vector<128x128xf32>
    %16 = arith.addf %12, %15 : vector<128x128xf32>
    %c1_8 = arith.constant 1 : index
    %c0_9 = arith.constant 0 : index
    %c0_10 = arith.constant 0 : index
    %17 = vector.load %arg2[%c1_8, %c0_9, %c0_10] : memref<4x128x1xf32, #tpu.memory_space<vmem>>, vector<1x128x1xf32>
    %18 = vector.shape_cast %17 : vector<1x128x1xf32> to vector<128x1xf32>
    %19 = arith.subf %5, %10 : vector<128x128xf32>
    %20 = vector.broadcast %18 : vector<128x1xf32> to vector<128x128xf32>
    %21 = arith.mulf %20, %19 : vector<128x128xf32>
    %22 = arith.addf %3, %21 : vector<128x128xf32>
    %c2 = arith.constant 2 : index
    %c0_11 = arith.constant 0 : index
    %c0_12 = arith.constant 0 : index
    %23 = vector.load %arg0[%c2, %c0_11, %c0_12] : memref<4x128x128xf32, #tpu.memory_space<vmem>>, vector<1x128x128xf32>
    %24 = vector.shape_cast %23 : vector<1x128x128xf32> to vector<128x128xf32>
    %cst_13 = arith.constant 0.666666686 : f32
    %25 = vector.broadcast %cst_13 : f32 to vector<128x128xf32>
    %26 = arith.mulf %10, %25 : vector<128x128xf32>
    %cst_14 = arith.constant 0.333333343 : f32
    %27 = vector.broadcast %cst_14 : f32 to vector<128x128xf32>
    %28 = arith.mulf %24, %27 : vector<128x128xf32>
    %29 = arith.addf %26, %28 : vector<128x128xf32>
    %cst_15 = arith.constant 0.666666686 : f32
    %30 = vector.broadcast %cst_15 : f32 to vector<128x128xf32>
    %31 = arith.mulf %16, %30 : vector<128x128xf32>
    %32 = arith.mulf %24, %24 : vector<128x128xf32>
    %cst_16 = arith.constant 0.333333343 : f32
    %33 = vector.broadcast %cst_16 : f32 to vector<128x128xf32>
    %34 = arith.mulf %32, %33 : vector<128x128xf32>
    %35 = arith.addf %31, %34 : vector<128x128xf32>
    %c2_17 = arith.constant 2 : index
    %c0_18 = arith.constant 0 : index
    %c0_19 = arith.constant 0 : index
    %36 = vector.load %arg2[%c2_17, %c0_18, %c0_19] : memref<4x128x1xf32, #tpu.memory_space<vmem>>, vector<1x128x1xf32>
    %37 = vector.shape_cast %36 : vector<1x128x1xf32> to vector<128x1xf32>
    %38 = arith.subf %24, %29 : vector<128x128xf32>
    %39 = vector.broadcast %37 : vector<128x1xf32> to vector<128x128xf32>
    %40 = arith.mulf %39, %38 : vector<128x128xf32>
    %41 = arith.addf %22, %40 : vector<128x128xf32>
    %c3 = arith.constant 3 : index
    %c0_20 = arith.constant 0 : index
    %c0_21 = arith.constant 0 : index
    %42 = vector.load %arg0[%c3, %c0_20, %c0_21] : memref<4x128x128xf32, #tpu.memory_space<vmem>>, vector<1x128x128xf32>
    %43 = vector.shape_cast %42 : vector<1x128x128xf32> to vector<128x128xf32>
    %cst_22 = arith.constant 7.500000e-01 : f32
    %44 = vector.broadcast %cst_22 : f32 to vector<128x128xf32>
    %45 = arith.mulf %29, %44 : vector<128x128xf32>
    %cst_23 = arith.constant 2.500000e-01 : f32
    %46 = vector.broadcast %cst_23 : f32 to vector<128x128xf32>
    %47 = arith.mulf %43, %46 : vector<128x128xf32>
    %48 = arith.addf %45, %47 : vector<128x128xf32>
    %cst_24 = arith.constant 7.500000e-01 : f32
    %49 = vector.broadcast %cst_24 : f32 to vector<128x128xf32>
    %50 = arith.mulf %35, %49 : vector<128x128xf32>
    %51 = arith.mulf %43, %43 : vector<128x128xf32>
    %cst_25 = arith.constant 2.500000e-01 : f32
    %52 = vector.broadcast %cst_25 : f32 to vector<128x128xf32>
    %53 = arith.mulf %51, %52 : vector<128x128xf32>
    %54 = arith.addf %50, %53 : vector<128x128xf32>
    %c3_26 = arith.constant 3 : index
    %c0_27 = arith.constant 0 : index
    %c0_28 = arith.constant 0 : index
    %55 = vector.load %arg2[%c3_26, %c0_27, %c0_28] : memref<4x128x1xf32, #tpu.memory_space<vmem>>, vector<1x128x1xf32>
    %56 = vector.shape_cast %55 : vector<1x128x1xf32> to vector<128x1xf32>
    %57 = arith.subf %43, %48 : vector<128x128xf32>
    %58 = vector.broadcast %56 : vector<128x1xf32> to vector<128x128xf32>
    %59 = arith.mulf %58, %57 : vector<128x128xf32>
    %60 = arith.addf %41, %59 : vector<128x128xf32>
    %61 = arith.mulf %48, %48 : vector<128x128xf32>
    %62 = arith.subf %54, %61 : vector<128x128xf32>
    %cst_29 = arith.constant 1.000000e-30 : f32
    %63 = vector.broadcast %cst_29 : f32 to vector<128x128xf32>
    %64 = arith.maximumf %62, %63 : vector<128x128xf32>
    %65 = math.sqrt %64 : vector<128x128xf32>
    %cst_30 = arith.constant 0.707106769 : f32
    %66 = vector.broadcast %cst_30 : f32 to vector<128x128xf32>
    %67 = arith.mulf %66, %65 : vector<128x128xf32>
    %c0_31 = arith.constant 0 : index
    %c0_32 = arith.constant 0 : index
    %68 = vector.load %arg1[%c0_31, %c0_32] : memref<128x128xf32, #tpu.memory_space<vmem>>, vector<128x128xf32>
    %69 = arith.mulf %67, %68 : vector<128x128xf32>
    %70 = arith.addf %48, %69 : vector<128x128xf32>
    %cst_33 = arith.constant 0.408248305 : f32
    %71 = vector.broadcast %cst_33 : f32 to vector<128x128xf32>
    %72 = arith.mulf %71, %60 : vector<128x128xf32>
    %73 = arith.addf %70, %72 : vector<128x128xf32>
    %c0_34 = arith.constant 0 : index
    %c0_35 = arith.constant 0 : index
    %74 = vector.load %arg4[%c0_34, %c0_35] : memref<128x128xf32, #tpu.memory_space<vmem>>, vector<128x128xf32>
    tpu.vector_store %arg4[%c0_34, %c0_35], %73 {strides = array<i32>} : memref<128x128xf32, #tpu.memory_space<vmem>>, vector<128x128xf32>,
    %c0_36 = arith.constant 0 : index
    %c0_37 = arith.constant 0 : index
    %75 = vector.load %arg3[%c0_36, %c0_37] : memref<8x128xf32, #tpu.memory_space<vmem>>, vector<8x128xf32>
    %cst_38 = arith.constant dense<0.000000e+00> : vector<8x128xf32>
    %76 = tpu.matmul %75, %73, %cst_38 {dimension_numbers = #tpu.dot_dimension_numbers<[1], [0], [0], [1], [0, 0, 1, 1], [], []>} : vector<8x128xf32>, vector<128x128xf32>, vector<8x128xf32> -> vector<8x128xf32>
    %c0_39 = arith.constant 0 : index
    %c0_40 = arith.constant 0 : index
    %77 = vector.load %arg5[%c0_39, %c0_40] : memref<8x128xf32, #tpu.memory_space<vmem>>, vector<8x128xf32>
    tpu.vector_store %arg5[%c0_39, %c0_40], %76 {strides = array<i32>} : memref<8x128xf32, #tpu.memory_space<vmem>>, vector<8x128xf32>,
    return
  }
}

</mosaic_0001>

<llo_original>
// kernel: swag_pipeline.1
$region0: #{swag_pipeline.1}
  #allocation0 [shape = 'u32[]', space=smem, size = 0x4, offset = 0x4, fixed_abs, tag = 'smem constant byte address 0x4 - core index']
  #allocation1 [shape = 'u32[144,128]{1,0:T(1,128)}', space=vmem, size = 0x12000, scoped, tag = 'internal scratch']
  %s0 = inlined_call_operand.vmem [shape: f32[4,128,128], index: 0, kind: input, shape index: {}]
  %s1 = inlined_call_operand.hbm [shape: f32[128,128], index: 1, kind: input, shape index: {}]
  %s2 = inlined_call_operand.vmem [shape: f32[4,128,1], index: 2, kind: input, shape index: {}]
  %s3 = inlined_call_operand.vmem [shape: f32[8,128], index: 3, kind: input, shape index: {}]
  %s4 = inlined_call_operand.vmem [shape: f32[128,128], index: 4, kind: output, shape index: {0}]
  %s5 = inlined_call_operand.vmem [shape: f32[8,128], index: 5, kind: output, shape index: {1}]
  %6 = xla_tuple %s4, %s5
  %s7 = sld [smem:[#allocation0]]
  $region38: #{swag_pipeline.1} parent=0
    _
  %s9 = ssub.s32 1, %s7
  %s10 = scalar_select 0, %s9, %s7
  $region1: #{swag_pipeline.1} parent=0
    #allocation2 [shape = 'u8[65536]{0}', space=vmem, size = 0x10000, scoped, tag = 'input window, operand 1, single buffered']
    #allocation3 [shape = 's32[1]{0}', space=sflag, size = 0x4, scoped, tag = 'scoped memory for swag_pipeline.1']
    %11 = vsyncpa [#allocation3], 0
    // Predicated region
    $region2: #{swag_pipeline.1} parent=1 // pred_check
      _
    $region3: #{swag_pipeline.1} parent=1 // pred_check_branch
      %13 = sbr.rel (0) target = $region5
    $region4: #{swag_pipeline.1} parent=1 // pred_region
      _
    $region5: #{swag_pipeline.1} parent=1 // pred_fallthru
      _
    // Predicated region
    $region6: #{swag_pipeline.1} parent=1 // pred_check
      _
    $region7: #{swag_pipeline.1} parent=1 // pred_check_branch
      %15 = sbr.rel (0) target = $region9
    $region8: #{swag_pipeline.1} parent=1 // pred_region
      %s17 = ssub.s32 2048, 2048
      %18 = vsyncadd [#allocation3], %s17
      %s19 = sshll.u32 [#allocation2], 4
      %s20 = int_to_ptr.vmem [resolvable:$true] %s19
      %25 = dma.hbm_to_vmem [thread:$0]  %s1, 2048, %s20, [#allocation3], 128, 128, 8
    $region9: #{swag_pipeline.1} parent=1 // pred_fallthru
      _
    // Predicated region
    $region10: #{swag_pipeline.1} parent=1 // pred_check
      _
    $region11: #{swag_pipeline.1} parent=1 // pred_check_branch
      %27 = sbr.rel (0) target = $region13
    $region12: #{swag_pipeline.1} parent=1 // pred_region
      _
    $region13: #{swag_pipeline.1} parent=1 // pred_fallthru
      _
    // Predicated region
    $region14: #{swag_pipeline.1} parent=1 // pred_check
      _
    $region15: #{swag_pipeline.1} parent=1 // pred_check_branch
      %29 = sbr.rel (0) target = $region17
    $region16: #{swag_pipeline.1} parent=1 // pred_region
      _
    $region17: #{swag_pipeline.1} parent=1 // pred_fallthru
      _
    // Predicated region
    $region18: #{swag_pipeline.1} parent=1 // pred_check
      _
    $region19: #{swag_pipeline.1} parent=1 // pred_check_branch
      %31 = sbr.rel (0) target = $region21
    $region20: #{swag_pipeline.1} parent=1 // pred_region
      %32 = dma.done [#allocation3], 2048
    $region21: #{swag_pipeline.1} parent=1 // pred_fallthru
      _
    %v33 = vld [vmem:[%s0] sm:$0xff]
    %v34 = vld [vmem:[%s0 + $0x8] sm:$0xff]
    %v35 = vld [vmem:[%s0 + $0x10] sm:$0xff]
    %v36 = vld [vmem:[%s0 + $0x18] sm:$0xff]
    %v37 = vld [vmem:[%s0 + $0x20] sm:$0xff]
    %v38 = vld [vmem:[%s0 + $0x28] sm:$0xff]
    %v39 = vld [vmem:[%s0 + $0x30] sm:$0xff]
    %v40 = vld [vmem:[%s0 + $0x38] sm:$0xff]
    %v41 = vld [vmem:[%s0 + $0x40] sm:$0xff]
    %v42 = vld [vmem:[%s0 + $0x48] sm:$0xff]
    %v43 = vld [vmem:[%s0 + $0x50] sm:$0xff]
    %v44 = vld [vmem:[%s0 + $0x58] sm:$0xff]
    %v45 = vld [vmem:[%s0 + $0x60] sm:$0xff]
    %v46 = vld [vmem:[%s0 + $0x68] sm:$0xff]
    %v47 = vld [vmem:[%s0 + $0x70] sm:$0xff]
    %v48 = vld [vmem:[%s0 + $0x78] sm:$0xff]
    %v49 = vmul.f32 %v33, %v33
    %v50 = vmul.f32 %v34, %v34
    %v51 = vmul.f32 %v35, %v35
    %v52 = vmul.f32 %v36, %v36
    %v53 = vmul.f32 %v37, %v37
    %v54 = vmul.f32 %v38, %v38
    %v55 = vmul.f32 %v39, %v39
    %v56 = vmul.f32 %v40, %v40
    %v57 = vmul.f32 %v41, %v41
    %v58 = vmul.f32 %v42, %v42
    %v59 = vmul.f32 %v43, %v43
    %v60 = vmul.f32 %v44, %v44
    %v61 = vmul.f32 %v45, %v45
    %v62 = vmul.f32 %v46, %v46
    %v63 = vmul.f32 %v47, %v47
    %v64 = vmul.f32 %v48, %v48
    %s65 = scalar_lea.vmem %s0, 128
    %v66 = vld [vmem:[%s65] sm:$0xff]
    %v67 = vld [vmem:[%s65 + $0x8] sm:$0xff]
    %v68 = vld [vmem:[%s65 + $0x10] sm:$0xff]
    %v69 = vld [vmem:[%s65 + $0x18] sm:$0xff]
    %v70 = vld [vmem:[%s65 + $0x20] sm:$0xff]
    %v71 = vld [vmem:[%s65 + $0x28] sm:$0xff]
    %v72 = vld [vmem:[%s65 + $0x30] sm:$0xff]
    %v73 = vld [vmem:[%s65 + $0x38] sm:$0xff]
    %v74 = vld [vmem:[%s65 + $0x40] sm:$0xff]
    %v75 = vld [vmem:[%s65 + $0x48] sm:$0xff]
    %v76 = vld [vmem:[%s65 + $0x50] sm:$0xff]
    %v77 = vld [vmem:[%s65 + $0x58] sm:$0xff]
    %v78 = vld [vmem:[%s65 + $0x60] sm:$0xff]
    %v79 = vld [vmem:[%s65 + $0x68] sm:$0xff]
    %v80 = vld [vmem:[%s65 + $0x70] sm:$0xff]
    %v81 = vld [vmem:[%s65 + $0x78] sm:$0xff]
    %v82 = vmul.f32 %v33, 0.5
    %v83 = vmul.f32 %v34, 0.5
    %v84 = vmul.f32 %v35, 0.5
    %v85 = vmul.f32 %v36, 0.5
    %v86 = vmul.f32 %v37, 0.5
    %v87 = vmul.f32 %v38, 0.5
    %v88 = vmul.f32 %v39, 0.5
    %v89 = vmul.f32 %v40, 0.5
    %v90 = vmul.f32 %v41, 0.5
    %v91 = vmul.f32 %v42, 0.5
    %v92 = vmul.f32 %v43, 0.5
    %v93 = vmul.f32 %v44, 0.5
    %v94 = vmul.f32 %v45, 0.5
    %v95 = vmul.f32 %v46, 0.5
    %v96 = vmul.f32 %v47, 0.5
    %v97 = vmul.f32 %v48, 0.5
    %v98 = vmul.f32 %v66, 0.5
    %v99 = vmul.f32 %v67, 0.5
    %v100 = vmul.f32 %v68, 0.5
    %v101 = vmul.f32 %v69, 0.5
    %v102 = vmul.f32 %v70, 0.5
    %v103 = vmul.f32 %v71, 0.5
    %v104 = vmul.f32 %v72, 0.5
    %v105 = vmul.f32 %v73, 0.5
    %v106 = vmul.f32 %v74, 0.5
    %v107 = vmul.f32 %v75, 0.5
    %v108 = vmul.f32 %v76, 0.5
    %v109 = vmul.f32 %v77, 0.5
    %v110 = vmul.f32 %v78, 0.5
    %v111 = vmul.f32 %v79, 0.5
    %v112 = vmul.f32 %v80, 0.5
    %v113 = vmul.f32 %v81, 0.5
    %v114 = vadd.f32 %v82, %v98
    %v115 = vadd.f32 %v83, %v99
    %v116 = vadd.f32 %v84, %v100
    %v117 = vadd.f32 %v85, %v101
    %v118 = vadd.f32 %v86, %v102
    %v119 = vadd.f32 %v87, %v103
    %v120 = vadd.f32 %v88, %v104
    %v121 = vadd.f32 %v89, %v105
    %v122 = vadd.f32 %v90, %v106
    %v123 = vadd.f32 %v91, %v107
    %v124 = vadd.f32 %v92, %v108
    %v125 = vadd.f32 %v93, %v109
    %v126 = vadd.f32 %v94, %v110
    %v127 = vadd.f32 %v95, %v111
    %v128 = vadd.f32 %v96, %v112
    %v129 = vadd.f32 %v97, %v113
    %v130 = vmul.f32 %v49, 0.5
    %v131 = vmul.f32 %v50, 0.5
    %v132 = vmul.f32 %v51, 0.5
    %v133 = vmul.f32 %v52, 0.5
    %v134 = vmul.f32 %v53, 0.5
    %v135 = vmul.f32 %v54, 0.5
    %v136 = vmul.f32 %v55, 0.5
    %v137 = vmul.f32 %v56, 0.5
    %v138 = vmul.f32 %v57, 0.5
    %v139 = vmul.f32 %v58, 0.5
    %v140 = vmul.f32 %v59, 0.5
    %v141 = vmul.f32 %v60, 0.5
    %v142 = vmul.f32 %v61, 0.5
    %v143 = vmul.f32 %v62, 0.5
    %v144 = vmul.f32 %v63, 0.5
    %v145 = vmul.f32 %v64, 0.5
    %v146 = vmul.f32 %v66, %v66
    %v147 = vmul.f32 %v67, %v67
    %v148 = vmul.f32 %v68, %v68
    %v149 = vmul.f32 %v69, %v69
    %v150 = vmul.f32 %v70, %v70
    %v151 = vmul.f32 %v71, %v71
    %v152 = vmul.f32 %v72, %v72
    %v153 = vmul.f32 %v73, %v73
    %v154 = vmul.f32 %v74, %v74
    %v155 = vmul.f32 %v75, %v75
    %v156 = vmul.f32 %v76, %v76
    %v157 = vmul.f32 %v77, %v77
    %v158 = vmul.f32 %v78, %v78
    %v159 = vmul.f32 %v79, %v79
    %v160 = vmul.f32 %v80, %v80
    %v161 = vmul.f32 %v81, %v81
    %v162 = vmul.f32 %v146, 0.5
    %v163 = vmul.f32 %v147, 0.5
    %v164 = vmul.f32 %v148, 0.5
    %v165 = vmul.f32 %v149, 0.5
    %v166 = vmul.f32 %v150, 0.5
    %v167 = vmul.f32 %v151, 0.5
    %v168 = vmul.f32 %v152, 0.5
    %v169 = vmul.f32 %v153, 0.5
    %v170 = vmul.f32 %v154, 0.5
    %v171 = vmul.f32 %v155, 0.5
    %v172 = vmul.f32 %v156, 0.5
    %v173 = vmul.f32 %v157, 0.5
    %v174 = vmul.f32 %v158, 0.5
    %v175 = vmul.f32 %v159, 0.5
    %v176 = vmul.f32 %v160, 0.5
    %v177 = vmul.f32 %v161, 0.5
    %v178 = vadd.f32 %v130, %v162
    %v179 = vadd.f32 %v131, %v163
    %v180 = vadd.f32 %v132, %v164
    %v181 = vadd.f32 %v133, %v165
    %v182 = vadd.f32 %v134, %v166
    %v183 = vadd.f32 %v135, %v167
    %v184 = vadd.f32 %v136, %v168
    %v185 = vadd.f32 %v137, %v169
    %v186 = vadd.f32 %v138, %v170
    %v187 = vadd.f32 %v139, %v171
    %v188 = vadd.f32 %v140, %v172
    %v189 = vadd.f32 %v141, %v173
    %v190 = vadd.f32 %v142, %v174
    %v191 = vadd.f32 %v143, %v175
    %v192 = vadd.f32 %v144, %v176
    %v193 = vadd.f32 %v145, %v177
    %s194 = scalar_lea.vmem %s2, 128
    %v195 = vld [vmem:[%s194] sm:$0xff]
    %v196 = vld [vmem:[%s194 + $0x8] sm:$0xff]
    %v197 = vld [vmem:[%s194 + $0x10] sm:$0xff]
    %v198 = vld [vmem:[%s194 + $0x18] sm:$0xff]
    %v199 = vld [vmem:[%s194 + $0x20] sm:$0xff]
    %v200 = vld [vmem:[%s194 + $0x28] sm:$0xff]
    %v201 = vld [vmem:[%s194 + $0x30] sm:$0xff]
    %v202 = vld [vmem:[%s194 + $0x38] sm:$0xff]
    %v203 = vld [vmem:[%s194 + $0x40] sm:$0xff]
    %v204 = vld [vmem:[%s194 + $0x48] sm:$0xff]
    %v205 = vld [vmem:[%s194 + $0x50] sm:$0xff]
    %v206 = vld [vmem:[%s194 + $0x58] sm:$0xff]
    %v207 = vld [vmem:[%s194 + $0x60] sm:$0xff]
    %v208 = vld [vmem:[%s194 + $0x68] sm:$0xff]
    %v209 = vld [vmem:[%s194 + $0x70] sm:$0xff]
    %v210 = vld [vmem:[%s194 + $0x78] sm:$0xff]
    %v211 = vsub.f32 %v66, %v114
    %v212 = vsub.f32 %v67, %v115
    %v213 = vsub.f32 %v68, %v116
    %v214 = vsub.f32 %v69, %v117
    %v215 = vsub.f32 %v70, %v118
    %v216 = vsub.f32 %v71, %v119
    %v217 = vsub.f32 %v72, %v120
    %v218 = vsub.f32 %v73, %v121
    %v219 = vsub.f32 %v74, %v122
    %v220 = vsub.f32 %v75, %v123
    %v221 = vsub.f32 %v76, %v124
    %v222 = vsub.f32 %v77, %v125
    %v223 = vsub.f32 %v78, %v126
    %v224 = vsub.f32 %v79, %v127
    %v225 = vsub.f32 %v80, %v128
    %v226 = vsub.f32 %v81, %v129
    %228 = vset.pattern.permute.xlu0 0
    %229 = vperm.xlu0 %228, %v195
    %v230 = vpop.permute.xlu0 %229
    %233 = vset.pattern.permute.xlu0 0
    %234 = vperm.xlu0 %233, %v196
    %v235 = vpop.permute.xlu0 %234
    %238 = vset.pattern.permute.xlu0 0
    %239 = vperm.xlu0 %238, %v197
    %v240 = vpop.permute.xlu0 %239
    %243 = vset.pattern.permute.xlu0 0
    %244 = vperm.xlu0 %243, %v198
    %v245 = vpop.permute.xlu0 %244
    %248 = vset.pattern.permute.xlu0 0
    %249 = vperm.xlu0 %248, %v199
    %v250 = vpop.permute.xlu0 %249
    %253 = vset.pattern.permute.xlu0 0
    %254 = vperm.xlu0 %253, %v200
    %v255 = vpop.permute.xlu0 %254
    %258 = vset.pattern.permute.xlu0 0
    %259 = vperm.xlu0 %258, %v201
    %v260 = vpop.permute.xlu0 %259
    %263 = vset.pattern.permute.xlu0 0
    %264 = vperm.xlu0 %263, %v202
    %v265 = vpop.permute.xlu0 %264
    %268 = vset.pattern.permute.xlu0 0
    %269 = vperm.xlu0 %268, %v203
    %v270 = vpop.permute.xlu0 %269
    %273 = vset.pattern.permute.xlu0 0
    %274 = vperm.xlu0 %273, %v204
    %v275 = vpop.permute.xlu0 %274
    %278 = vset.pattern.permute.xlu0 0
    %279 = vperm.xlu0 %278, %v205
    %v280 = vpop.permute.xlu0 %279
    %283 = vset.pattern.permute.xlu0 0
    %284 = vperm.xlu0 %283, %v206
    %v285 = vpop.permute.xlu0 %284
    %288 = vset.pattern.permute.xlu0 0
    %289 = vperm.xlu0 %288, %v207
    %v290 = vpop.permute.xlu0 %289
    %293 = vset.pattern.permute.xlu0 0
    %294 = vperm.xlu0 %293, %v208
    %v295 = vpop.permute.xlu0 %294
    %298 = vset.pattern.permute.xlu0 0
    %299 = vperm.xlu0 %298, %v209
    %v300 = vpop.permute.xlu0 %299
    %303 = vset.pattern.permute.xlu0 0
    %304 = vperm.xlu0 %303, %v210
    %v305 = vpop.permute.xlu0 %304
    %v307 = vmul.f32 %v230, %v211
    %v308 = vmul.f32 %v235, %v212
    %v309 = vmul.f32 %v240, %v213
    %v310 = vmul.f32 %v245, %v214
    %v311 = vmul.f32 %v250, %v215
    %v312 = vmul.f32 %v255, %v216
    %v313 = vmul.f32 %v260, %v217
    %v314 = vmul.f32 %v265, %v218
    %v315 = vmul.f32 %v270, %v219
    %v316 = vmul.f32 %v275, %v220
    %v317 = vmul.f32 %v280, %v221
    %v318 = vmul.f32 %v285, %v222
    %v319 = vmul.f32 %v290, %v223
    %v320 = vmul.f32 %v295, %v224
    %v321 = vmul.f32 %v300, %v225
    %v322 = vmul.f32 %v305, %v226
    %v323 = vadd.f32 %v307, 0.0
    %v324 = vadd.f32 %v308, 0.0
    %v325 = vadd.f32 %v309, 0.0
    %v326 = vadd.f32 %v310, 0.0
    %v327 = vadd.f32 %v311, 0.0
    %v328 = vadd.f32 %v312, 0.0
    %v329 = vadd.f32 %v313, 0.0
    %v330 = vadd.f32 %v314, 0.0
    %v331 = vadd.f32 %v315, 0.0
    %v332 = vadd.f32 %v316, 0.0
    %v333 = vadd.f32 %v317, 0.0
    %v334 = vadd.f32 %v318, 0.0
    %v335 = vadd.f32 %v319, 0.0
    %v336 = vadd.f32 %v320, 0.0
    %v337 = vadd.f32 %v321, 0.0
    %v338 = vadd.f32 %v322, 0.0
    %s339 = scalar_lea.vmem %s0, 256
    %v340 = vld [vmem:[%s339] sm:$0xff]
    %v341 = vld [vmem:[%s339 + $0x8] sm:$0xff]
    %v342 = vld [vmem:[%s339 + $0x10] sm:$0xff]
    %v343 = vld [vmem:[%s339 + $0x18] sm:$0xff]
    %v344 = vld [vmem:[%s339 + $0x20] sm:$0xff]
    %v345 = vld [vmem:[%s339 + $0x28] sm:$0xff]
    %v346 = vld [vmem:[%s339 + $0x30] sm:$0xff]
    %v347 = vld [vmem:[%s339 + $0x38] sm:$0xff]
    %v348 = vld [vmem:[%s339 + $0x40] sm:$0xff]
    %v349 = vld [vmem:[%s339 + $0x48] sm:$0xff]
    %v350 = vld [vmem:[%s339 + $0x50] sm:$0xff]
    %v351 = vld [vmem:[%s339 + $0x58] sm:$0xff]
    %v352 = vld [vmem:[%s339 + $0x60] sm:$0xff]
    %v353 = vld [vmem:[%s339 + $0x68] sm:$0xff]
    %v354 = vld [vmem:[%s339 + $0x70] sm:$0xff]
    %v355 = vld [vmem:[%s339 + $0x78] sm:$0xff]
    %v356 = vmul.f32 %v114, 0.6666667
    %v357 = vmul.f32 %v115, 0.6666667
    %v358 = vmul.f32 %v116, 0.6666667
    %v359 = vmul.f32 %v117, 0.6666667
    %v360 = vmul.f32 %v118, 0.6666667
    %v361 = vmul.f32 %v119, 0.6666667
    %v362 = vmul.f32 %v120, 0.6666667
    %v363 = vmul.f32 %v121, 0.6666667
    %v364 = vmul.f32 %v122, 0.6666667
    %v365 = vmul.f32 %v123, 0.6666667
    %v366 = vmul.f32 %v124, 0.6666667
    %v367 = vmul.f32 %v125, 0.6666667
    %v368 = vmul.f32 %v126, 0.6666667
    %v369 = vmul.f32 %v127, 0.6666667
    %v370 = vmul.f32 %v128, 0.6666667
    %v371 = vmul.f32 %v129, 0.6666667
    %v372 = vmul.f32 %v340, 0.33333334
    %v373 = vmul.f32 %v341, 0.33333334
    %v374 = vmul.f32 %v342, 0.33333334
    %v375 = vmul.f32 %v343, 0.33333334
    %v376 = vmul.f32 %v344, 0.33333334
    %v377 = vmul.f32 %v345, 0.33333334
    %v378 = vmul.f32 %v346, 0.33333334
    %v379 = vmul.f32 %v347, 0.33333334
    %v380 = vmul.f32 %v348, 0.33333334
    %v381 = vmul.f32 %v349, 0.33333334
    %v382 = vmul.f32 %v350, 0.33333334
    %v383 = vmul.f32 %v351, 0.33333334
    %v384 = vmul.f32 %v352, 0.33333334
    %v385 = vmul.f32 %v353, 0.33333334
    %v386 = vmul.f32 %v354, 0.33333334
    %v387 = vmul.f32 %v355, 0.33333334
    %v388 = vadd.f32 %v356, %v372
    %v389 = vadd.f32 %v357, %v373
    %v390 = vadd.f32 %v358, %v374
    %v391 = vadd.f32 %v359, %v375
    %v392 = vadd.f32 %v360, %v376
    %v393 = vadd.f32 %v361, %v377
    %v394 = vadd.f32 %v362, %v378
    %v395 = vadd.f32 %v363, %v379
    %v396 = vadd.f32 %v364, %v380
    %v397 = vadd.f32 %v365, %v381
    %v398 = vadd.f32 %v366, %v382
    %v399 = vadd.f32 %v367, %v383
    %v400 = vadd.f32 %v368, %v384
    %v401 = vadd.f32 %v369, %v385
    %v402 = vadd.f32 %v370, %v386
    %v403 = vadd.f32 %v371, %v387
    %v404 = vmul.f32 %v178, 0.6666667
    %v405 = vmul.f32 %v179, 0.6666667
    %v406 = vmul.f32 %v180, 0.6666667
    %v407 = vmul.f32 %v181, 0.6666667
    %v408 = vmul.f32 %v182, 0.6666667
    %v409 = vmul.f32 %v183, 0.6666667
    %v410 = vmul.f32 %v184, 0.6666667
    %v411 = vmul.f32 %v185, 0.6666667
    %v412 = vmul.f32 %v186, 0.6666667
    %v413 = vmul.f32 %v187, 0.6666667
    %v414 = vmul.f32 %v188, 0.6666667
    %v415 = vmul.f32 %v189, 0.6666667
    %v416 = vmul.f32 %v190, 0.6666667
    %v417 = vmul.f32 %v191, 0.6666667
    %v418 = vmul.f32 %v192, 0.6666667
    %v419 = vmul.f32 %v193, 0.6666667
    %v420 = vmul.f32 %v340, %v340
    %v421 = vmul.f32 %v341, %v341
    %v422 = vmul.f32 %v342, %v342
    %v423 = vmul.f32 %v343, %v343
    %v424 = vmul.f32 %v344, %v344
    %v425 = vmul.f32 %v345, %v345
    %v426 = vmul.f32 %v346, %v346
    %v427 = vmul.f32 %v347, %v347
    %v428 = vmul.f32 %v348, %v348
    %v429 = vmul.f32 %v349, %v349
    %v430 = vmul.f32 %v350, %v350
    %v431 = vmul.f32 %v351, %v351
    %v432 = vmul.f32 %v352, %v352
    %v433 = vmul.f32 %v353, %v353
    %v434 = vmul.f32 %v354, %v354
    %v435 = vmul.f32 %v355, %v355
    %v436 = vmul.f32 %v420, 0.33333334
    %v437 = vmul.f32 %v421, 0.33333334
    %v438 = vmul.f32 %v422, 0.33333334
    %v439 = vmul.f32 %v423, 0.33333334
    %v440 = vmul.f32 %v424, 0.33333334
    %v441 = vmul.f32 %v425, 0.33333334
    %v442 = vmul.f32 %v426, 0.33333334
    %v443 = vmul.f32 %v427, 0.33333334
    %v444 = vmul.f32 %v428, 0.33333334
    %v445 = vmul.f32 %v429, 0.33333334
    %v446 = vmul.f32 %v430, 0.33333334
    %v447 = vmul.f32 %v431, 0.33333334
    %v448 = vmul.f32 %v432, 0.33333334
    %v449 = vmul.f32 %v433, 0.33333334
    %v450 = vmul.f32 %v434, 0.33333334
    %v451 = vmul.f32 %v435, 0.33333334
    %v452 = vadd.f32 %v404, %v436
    %v453 = vadd.f32 %v405, %v437
    %v454 = vadd.f32 %v406, %v438
    %v455 = vadd.f32 %v407, %v439
    %v456 = vadd.f32 %v408, %v440
    %v457 = vadd.f32 %v409, %v441
    %v458 = vadd.f32 %v410, %v442
    %v459 = vadd.f32 %v411, %v443
    %v460 = vadd.f32 %v412, %v444
    %v461 = vadd.f32 %v413, %v445
    %v462 = vadd.f32 %v414, %v446
    %v463 = vadd.f32 %v415, %v447
    %v464 = vadd.f32 %v416, %v448
    %v465 = vadd.f32 %v417, %v449
    %v466 = vadd.f32 %v418, %v450
    %v467 = vadd.f32 %v419, %v451
    %s468 = scalar_lea.vmem %s2, 256
    %v469 = vld [vmem:[%s468] sm:$0xff]
    %v470 = vld [vmem:[%s468 + $0x8] sm:$0xff]
    %v471 = vld [vmem:[%s468 + $0x10] sm:$0xff]
    %v472 = vld [vmem:[%s468 + $0x18] sm:$0xff]
    %v473 = vld [vmem:[%s468 + $0x20] sm:$0xff]
    %v474 = vld [vmem:[%s468 + $0x28] sm:$0xff]
    %v475 = vld [vmem:[%s468 + $0x30] sm:$0xff]
    %v476 = vld [vmem:[%s468 + $0x38] sm:$0xff]
    %v477 = vld [vmem:[%s468 + $0x40] sm:$0xff]
    %v478 = vld [vmem:[%s468 + $0x48] sm:$0xff]
    %v479 = vld [vmem:[%s468 + $0x50] sm:$0xff]
    %v480 = vld [vmem:[%s468 + $0x58] sm:$0xff]
    %v481 = vld [vmem:[%s468 + $0x60] sm:$0xff]
    %v482 = vld [vmem:[%s468 + $0x68] sm:$0xff]
    %v483 = vld [vmem:[%s468 + $0x70] sm:$0xff]
    %v484 = vld [vmem:[%s468 + $0x78] sm:$0xff]
    %v485 = vsub.f32 %v340, %v388
    %v486 = vsub.f32 %v341, %v389
    %v487 = vsub.f32 %v342, %v390
    %v488 = vsub.f32 %v343, %v391
    %v489 = vsub.f32 %v344, %v392
    %v490 = vsub.f32 %v345, %v393
    %v491 = vsub.f32 %v346, %v394
    %v492 = vsub.f32 %v347, %v395
    %v493 = vsub.f32 %v348, %v396
    %v494 = vsub.f32 %v349, %v397
    %v495 = vsub.f32 %v350, %v398
    %v496 = vsub.f32 %v351, %v399
    %v497 = vsub.f32 %v352, %v400
    %v498 = vsub.f32 %v353, %v401
    %v499 = vsub.f32 %v354, %v402
    %v500 = vsub.f32 %v355, %v403
    %502 = vset.pattern.permute.xlu0 0
    %503 = vperm.xlu0 %502, %v469
    %v504 = vpop.permute.xlu0 %503
    %507 = vset.pattern.permute.xlu0 0
    %508 = vperm.xlu0 %507, %v470
    %v509 = vpop.permute.xlu0 %508
    %512 = vset.pattern.permute.xlu0 0
    %513 = vperm.xlu0 %512, %v471
    %v514 = vpop.permute.xlu0 %513
    %517 = vset.pattern.permute.xlu0 0
    %518 = vperm.xlu0 %517, %v472
    %v519 = vpop.permute.xlu0 %518
    %522 = vset.pattern.permute.xlu0 0
    %523 = vperm.xlu0 %522, %v473
    %v524 = vpop.permute.xlu0 %523
    %527 = vset.pattern.permute.xlu0 0
    %528 = vperm.xlu0 %527, %v474
    %v529 = vpop.permute.xlu0 %528
    %532 = vset.pattern.permute.xlu0 0
    %533 = vperm.xlu0 %532, %v475
    %v534 = vpop.permute.xlu0 %533
    %537 = vset.pattern.permute.xlu0 0
    %538 = vperm.xlu0 %537, %v476
    %v539 = vpop.permute.xlu0 %538
    %542 = vset.pattern.permute.xlu0 0
    %543 = vperm.xlu0 %542, %v477
    %v544 = vpop.permute.xlu0 %543
    %547 = vset.pattern.permute.xlu0 0
    %548 = vperm.xlu0 %547, %v478
    %v549 = vpop.permute.xlu0 %548
    %552 = vset.pattern.permute.xlu0 0
    %553 = vperm.xlu0 %552, %v479
    %v554 = vpop.permute.xlu0 %553
    %557 = vset.pattern.permute.xlu0 0
    %558 = vperm.xlu0 %557, %v480
    %v559 = vpop.permute.xlu0 %558
    %562 = vset.pattern.permute.xlu0 0
    %563 = vperm.xlu0 %562, %v481
    %v564 = vpop.permute.xlu0 %563
    %567 = vset.pattern.permute.xlu0 0
    %568 = vperm.xlu0 %567, %v482
    %v569 = vpop.permute.xlu0 %568
    %572 = vset.pattern.permute.xlu0 0
    %573 = vperm.xlu0 %572, %v483
    %v574 = vpop.permute.xlu0 %573
    %577 = vset.pattern.permute.xlu0 0
    %578 = vperm.xlu0 %577, %v484
    %v579 = vpop.permute.xlu0 %578
    %v581 = vmul.f32 %v504, %v485
    %v582 = vmul.f32 %v509, %v486
    %v583 = vmul.f32 %v514, %v487
    %v584 = vmul.f32 %v519, %v488
    %v585 = vmul.f32 %v524, %v489
    %v586 = vmul.f32 %v529, %v490
    %v587 = vmul.f32 %v534, %v491
    %v588 = vmul.f32 %v539, %v492
    %v589 = vmul.f32 %v544, %v493
    %v590 = vmul.f32 %v549, %v494
    %v591 = vmul.f32 %v554, %v495
    %v592 = vmul.f32 %v559, %v496
    %v593 = vmul.f32 %v564, %v497
    %v594 = vmul.f32 %v569, %v498
    %v595 = vmul.f32 %v574, %v499
    %v596 = vmul.f32 %v579, %v500
    %v597 = vadd.f32 %v323, %v581
    %v598 = vadd.f32 %v324, %v582
    %v599 = vadd.f32 %v325, %v583
    %v600 = vadd.f32 %v326, %v584
    %v601 = vadd.f32 %v327, %v585
    %v602 = vadd.f32 %v328, %v586
    %v603 = vadd.f32 %v329, %v587
    %v604 = vadd.f32 %v330, %v588
    %v605 = vadd.f32 %v331, %v589
    %v606 = vadd.f32 %v332, %v590
    %v607 = vadd.f32 %v333, %v591
    %v608 = vadd.f32 %v334, %v592
    %v609 = vadd.f32 %v335, %v593
    %v610 = vadd.f32 %v336, %v594
    %v611 = vadd.f32 %v337, %v595
    %v612 = vadd.f32 %v338, %v596
    %s613 = scalar_lea.vmem %s0, 384
    %v614 = vld [vmem:[%s613] sm:$0xff]
    %v615 = vld [vmem:[%s613 + $0x8] sm:$0xff]
    %v616 = vld [vmem:[%s613 + $0x10] sm:$0xff]
    %v617 = vld [vmem:[%s613 + $0x18] sm:$0xff]
    %v618 = vld [vmem:[%s613 + $0x20] sm:$0xff]
    %v619 = vld [vmem:[%s613 + $0x28] sm:$0xff]
    %v620 = vld [vmem:[%s613 + $0x30] sm:$0xff]
    %v621 = vld [vmem:[%s613 + $0x38] sm:$0xff]
    %v622 = vld [vmem:[%s613 + $0x40] sm:$0xff]
    %v623 = vld [vmem:[%s613 + $0x48] sm:$0xff]
    %v624 = vld [vmem:[%s613 + $0x50] sm:$0xff]
    %v625 = vld [vmem:[%s613 + $0x58] sm:$0xff]
    %v626 = vld [vmem:[%s613 + $0x60] sm:$0xff]
    %v627 = vld [vmem:[%s613 + $0x68] sm:$0xff]
    %v628 = vld [vmem:[%s613 + $0x70] sm:$0xff]
    %v629 = vld [vmem:[%s613 + $0x78] sm:$0xff]
    %v630 = vmul.f32 %v388, 0.75
    %v631 = vmul.f32 %v389, 0.75
    %v632 = vmul.f32 %v390, 0.75
    %v633 = vmul.f32 %v391, 0.75
    %v634 = vmul.f32 %v392, 0.75
    %v635 = vmul.f32 %v393, 0.75
    %v636 = vmul.f32 %v394, 0.75
    %v637 = vmul.f32 %v395, 0.75
    %v638 = vmul.f32 %v396, 0.75
    %v639 = vmul.f32 %v397, 0.75
    %v640 = vmul.f32 %v398, 0.75
    %v641 = vmul.f32 %v399, 0.75
    %v642 = vmul.f32 %v400, 0.75
    %v643 = vmul.f32 %v401, 0.75
    %v644 = vmul.f32 %v402, 0.75
    %v645 = vmul.f32 %v403, 0.75
    %v646 = vmul.f32 %v614, 0.25
    %v647 = vmul.f32 %v615, 0.25
    %v648 = vmul.f32 %v616, 0.25
    %v649 = vmul.f32 %v617, 0.25
    %v650 = vmul.f32 %v618, 0.25
    %v651 = vmul.f32 %v619, 0.25
    %v652 = vmul.f32 %v620, 0.25
    %v653 = vmul.f32 %v621, 0.25
    %v654 = vmul.f32 %v622, 0.25
    %v655 = vmul.f32 %v623, 0.25
    %v656 = vmul.f32 %v624, 0.25
    %v657 = vmul.f32 %v625, 0.25
    %v658 = vmul.f32 %v626, 0.25
    %v659 = vmul.f32 %v627, 0.25
    %v660 = vmul.f32 %v628, 0.25
    %v661 = vmul.f32 %v629, 0.25
    %v662 = vadd.f32 %v630, %v646
    %v663 = vadd.f32 %v631, %v647
    %v664 = vadd.f32 %v632, %v648
    %v665 = vadd.f32 %v633, %v649
    %v666 = vadd.f32 %v634, %v650
    %v667 = vadd.f32 %v635, %v651
    %v668 = vadd.f32 %v636, %v652
    %v669 = vadd.f32 %v637, %v653
    %v670 = vadd.f32 %v638, %v654
    %v671 = vadd.f32 %v639, %v655
    %v672 = vadd.f32 %v640, %v656
    %v673 = vadd.f32 %v641, %v657
    %v674 = vadd.f32 %v642, %v658
    %v675 = vadd.f32 %v643, %v659
    %v676 = vadd.f32 %v644, %v660
    %v677 = vadd.f32 %v645, %v661
    %v678 = vmul.f32 %v452, 0.75
    %v679 = vmul.f32 %v453, 0.75
    %v680 = vmul.f32 %v454, 0.75
    %v681 = vmul.f32 %v455, 0.75
    %v682 = vmul.f32 %v456, 0.75
    %v683 = vmul.f32 %v457, 0.75
    %v684 = vmul.f32 %v458, 0.75
    %v685 = vmul.f32 %v459, 0.75
    %v686 = vmul.f32 %v460, 0.75
    %v687 = vmul.f32 %v461, 0.75
    %v688 = vmul.f32 %v462, 0.75
    %v689 = vmul.f32 %v463, 0.75
    %v690 = vmul.f32 %v464, 0.75
    %v691 = vmul.f32 %v465, 0.75
    %v692 = vmul.f32 %v466, 0.75
    %v693 = vmul.f32 %v467, 0.75
    %v694 = vmul.f32 %v614, %v614
    %v695 = vmul.f32 %v615, %v615
    %v696 = vmul.f32 %v616, %v616
    %v697 = vmul.f32 %v617, %v617
    %v698 = vmul.f32 %v618, %v618
    %v699 = vmul.f32 %v619, %v619
    %v700 = vmul.f32 %v620, %v620
    %v701 = vmul.f32 %v621, %v621
    %v702 = vmul.f32 %v622, %v622
    %v703 = vmul.f32 %v623, %v623
    %v704 = vmul.f32 %v624, %v624
    %v705 = vmul.f32 %v625, %v625
    %v706 = vmul.f32 %v626, %v626
    %v707 = vmul.f32 %v627, %v627
    %v708 = vmul.f32 %v628, %v628
    %v709 = vmul.f32 %v629, %v629
    %v710 = vmul.f32 %v694, 0.25
    %v711 = vmul.f32 %v695, 0.25
    %v712 = vmul.f32 %v696, 0.25
    %v713 = vmul.f32 %v697, 0.25
    %v714 = vmul.f32 %v698, 0.25
    %v715 = vmul.f32 %v699, 0.25
    %v716 = vmul.f32 %v700, 0.25
    %v717 = vmul.f32 %v701, 0.25
    %v718 = vmul.f32 %v702, 0.25
    %v719 = vmul.f32 %v703, 0.25
    %v720 = vmul.f32 %v704, 0.25
    %v721 = vmul.f32 %v705, 0.25
    %v722 = vmul.f32 %v706, 0.25
    %v723 = vmul.f32 %v707, 0.25
    %v724 = vmul.f32 %v708, 0.25
    %v725 = vmul.f32 %v709, 0.25
    %v726 = vadd.f32 %v678, %v710
    %v727 = vadd.f32 %v679, %v711
    %v728 = vadd.f32 %v680, %v712
    %v729 = vadd.f32 %v681, %v713
    %v730 = vadd.f32 %v682, %v714
    %v731 = vadd.f32 %v683, %v715
    %v732 = vadd.f32 %v684, %v716
    %v733 = vadd.f32 %v685, %v717
    %v734 = vadd.f32 %v686, %v718
    %v735 = vadd.f32 %v687, %v719
    %v736 = vadd.f32 %v688, %v720
    %v737 = vadd.f32 %v689, %v721
    %v738 = vadd.f32 %v690, %v722
    %v739 = vadd.f32 %v691, %v723
    %v740 = vadd.f32 %v692, %v724
    %v741 = vadd.f32 %v693, %v725
    %s742 = scalar_lea.vmem %s2, 384
    %v743 = vld [vmem:[%s742] sm:$0xff]
    %v744 = vld [vmem:[%s742 + $0x8] sm:$0xff]
    %v745 = vld [vmem:[%s742 + $0x10] sm:$0xff]
    %v746 = vld [vmem:[%s742 + $0x18] sm:$0xff]
    %v747 = vld [vmem:[%s742 + $0x20] sm:$0xff]
    %v748 = vld [vmem:[%s742 + $0x28] sm:$0xff]
    %v749 = vld [vmem:[%s742 + $0x30] sm:$0xff]
    %v750 = vld [vmem:[%s742 + $0x38] sm:$0xff]
    %v751 = vld [vmem:[%s742 + $0x40] sm:$0xff]
    %v752 = vld [vmem:[%s742 + $0x48] sm:$0xff]
    %v753 = vld [vmem:[%s742 + $0x50] sm:$0xff]
    %v754 = vld [vmem:[%s742 + $0x58] sm:$0xff]
    %v755 = vld [vmem:[%s742 + $0x60] sm:$0xff]
    %v756 = vld [vmem:[%s742 + $0x68] sm:$0xff]
    %v757 = vld [vmem:[%s742 + $0x70] sm:$0xff]
    %v758 = vld [vmem:[%s742 + $0x78] sm:$0xff]
    %v759 = vsub.f32 %v614, %v662
    %v760 = vsub.f32 %v615, %v663
    %v761 = vsub.f32 %v616, %v664
    %v762 = vsub.f32 %v617, %v665
    %v763 = vsub.f32 %v618, %v666
    %v764 = vsub.f32 %v619, %v667
    %v765 = vsub.f32 %v620, %v668
    %v766 = vsub.f32 %v621, %v669
    %v767 = vsub.f32 %v622, %v670
    %v768 = vsub.f32 %v623, %v671
    %v769 = vsub.f32 %v624, %v672
    %v770 = vsub.f32 %v625, %v673
    %v771 = vsub.f32 %v626, %v674
    %v772 = vsub.f32 %v627, %v675
    %v773 = vsub.f32 %v628, %v676
    %v774 = vsub.f32 %v629, %v677
    %776 = vset.pattern.permute.xlu0 0
    %777 = vperm.xlu0 %776, %v743
    %v778 = vpop.permute.xlu0 %777
    %781 = vset.pattern.permute.xlu0 0
    %782 = vperm.xlu0 %781, %v744
    %v783 = vpop.permute.xlu0 %782
    %786 = vset.pattern.permute.xlu0 0
    %787 = vperm.xlu0 %786, %v745
    %v788 = vpop.permute.xlu0 %787
    %791 = vset.pattern.permute.xlu0 0
    %792 = vperm.xlu0 %791, %v746
    %v793 = vpop.permute.xlu0 %792
    %796 = vset.pattern.permute.xlu0 0
    %797 = vperm.xlu0 %796, %v747
    %v798 = vpop.permute.xlu0 %797
    %801 = vset.pattern.permute.xlu0 0
    %802 = vperm.xlu0 %801, %v748
    %v803 = vpop.permute.xlu0 %802
    %806 = vset.pattern.permute.xlu0 0
    %807 = vperm.xlu0 %806, %v749
    %v808 = vpop.permute.xlu0 %807
    %811 = vset.pattern.permute.xlu0 0
    %812 = vperm.xlu0 %811, %v750
    %v813 = vpop.permute.xlu0 %812
    %816 = vset.pattern.permute.xlu0 0
    %817 = vperm.xlu0 %816, %v751
    %v818 = vpop.permute.xlu0 %817
    %821 = vset.pattern.permute.xlu0 0
    %822 = vperm.xlu0 %821, %v752
    %v823 = vpop.permute.xlu0 %822
    %826 = vset.pattern.permute.xlu0 0
    %827 = vperm.xlu0 %826, %v753
    %v828 = vpop.permute.xlu0 %827
    %831 = vset.pattern.permute.xlu0 0
    %832 = vperm.xlu0 %831, %v754
    %v833 = vpop.permute.xlu0 %832
    %836 = vset.pattern.permute.xlu0 0
    %837 = vperm.xlu0 %836, %v755
    %v838 = vpop.permute.xlu0 %837
    %841 = vset.pattern.permute.xlu0 0
    %842 = vperm.xlu0 %841, %v756
    %v843 = vpop.permute.xlu0 %842
    %846 = vset.pattern.permute.xlu0 0
    %847 = vperm.xlu0 %846, %v757
    %v848 = vpop.permute.xlu0 %847
    %851 = vset.pattern.permute.xlu0 0
    %852 = vperm.xlu0 %851, %v758
    %v853 = vpop.permute.xlu0 %852
    %v855 = vmul.f32 %v778, %v759
    %v856 = vmul.f32 %v783, %v760
    %v857 = vmul.f32 %v788, %v761
    %v858 = vmul.f32 %v793, %v762
    %v859 = vmul.f32 %v798, %v763
    %v860 = vmul.f32 %v803, %v764
    %v861 = vmul.f32 %v808, %v765
    %v862 = vmul.f32 %v813, %v766
    %v863 = vmul.f32 %v818, %v767
    %v864 = vmul.f32 %v823, %v768
    %v865 = vmul.f32 %v828, %v769
    %v866 = vmul.f32 %v833, %v770
    %v867 = vmul.f32 %v838, %v771
    %v868 = vmul.f32 %v843, %v772
    %v869 = vmul.f32 %v848, %v773
    %v870 = vmul.f32 %v853, %v774
    %v871 = vadd.f32 %v597, %v855
    %v872 = vadd.f32 %v598, %v856
    %v873 = vadd.f32 %v599, %v857
    %v874 = vadd.f32 %v600, %v858
    %v875 = vadd.f32 %v601, %v859
    %v876 = vadd.f32 %v602, %v860
    %v877 = vadd.f32 %v603, %v861
    %v878 = vadd.f32 %v604, %v862
    %v879 = vadd.f32 %v605, %v863
    %v880 = vadd.f32 %v606, %v864
    %v881 = vadd.f32 %v607, %v865
    %v882 = vadd.f32 %v608, %v866
    %v883 = vadd.f32 %v609, %v867
    %v884 = vadd.f32 %v610, %v868
    %v885 = vadd.f32 %v611, %v869
    %v886 = vadd.f32 %v612, %v870
    %v887 = vmul.f32 %v662, %v662
    %v888 = vmul.f32 %v663, %v663
    %v889 = vmul.f32 %v664, %v664
    %v890 = vmul.f32 %v665, %v665
    %v891 = vmul.f32 %v666, %v666
    %v892 = vmul.f32 %v667, %v667
    %v893 = vmul.f32 %v668, %v668
    %v894 = vmul.f32 %v669, %v669
    %v895 = vmul.f32 %v670, %v670
    %v896 = vmul.f32 %v671, %v671
    %v897 = vmul.f32 %v672, %v672
    %v898 = vmul.f32 %v673, %v673
    %v899 = vmul.f32 %v674, %v674
    %v900 = vmul.f32 %v675, %v675
    %v901 = vmul.f32 %v676, %v676
    %v902 = vmul.f32 %v677, %v677
    %v903 = vsub.f32 %v726, %v887
    %v904 = vsub.f32 %v727, %v888
    %v905 = vsub.f32 %v728, %v889
    %v906 = vsub.f32 %v729, %v890
    %v907 = vsub.f32 %v730, %v891
    %v908 = vsub.f32 %v731, %v892
    %v909 = vsub.f32 %v732, %v893
    %v910 = vsub.f32 %v733, %v894
    %v911 = vsub.f32 %v734, %v895
    %v912 = vsub.f32 %v735, %v896
    %v913 = vsub.f32 %v736, %v897
    %v914 = vsub.f32 %v737, %v898
    %v915 = vsub.f32 %v738, %v899
    %v916 = vsub.f32 %v739, %v900
    %v917 = vsub.f32 %v740, %v901
    %v918 = vsub.f32 %v741, %v902
    %v919 = vmax.f32 %v903, 1e-30
    %v920 = vmax.f32 %v904, 1e-30
    %v921 = vmax.f32 %v905, 1e-30
    %v922 = vmax.f32 %v906, 1e-30
    %v923 = vmax.f32 %v907, 1e-30
    %v924 = vmax.f32 %v908, 1e-30
    %v925 = vmax.f32 %v909, 1e-30
    %v926 = vmax.f32 %v910, 1e-30
    %v927 = vmax.f32 %v911, 1e-30
    %v928 = vmax.f32 %v912, 1e-30
    %v929 = vmax.f32 %v913, 1e-30
    %v930 = vmax.f32 %v914, 1e-30
    %v931 = vmax.f32 %v915, 1e-30
    %v932 = vmax.f32 %v916, 1e-30
    %v933 = vmax.f32 %v917, 1e-30
    %v934 = vmax.f32 %v918, 1e-30
    %v935 = vrsqrt.pop %v919
    %v936 = vmul.f32 %v919, %v935
    %vm937 = vcmp.eq.f32.partialorder %v919, inf
    %v938 = vsel %vm937, %v919, %v936
    %vm939 = vcmp.eq.f32.partialorder %v919, 0.0
    %v940 = vand.u32 %v919, 2147483648
    %v941 = vsel %vm939, %v940, %v938
    %v942 = vrsqrt.pop %v920
    %v943 = vmul.f32 %v920, %v942
    %vm944 = vcmp.eq.f32.partialorder %v920, inf
    %v945 = vsel %vm944, %v920, %v943
    %vm946 = vcmp.eq.f32.partialorder %v920, 0.0
    %v947 = vand.u32 %v920, 2147483648
    %v948 = vsel %vm946, %v947, %v945
    %v949 = vrsqrt.pop %v921
    %v950 = vmul.f32 %v921, %v949
    %vm951 = vcmp.eq.f32.partialorder %v921, inf
    %v952 = vsel %vm951, %v921, %v950
    %vm953 = vcmp.eq.f32.partialorder %v921, 0.0
    %v954 = vand.u32 %v921, 2147483648
    %v955 = vsel %vm953, %v954, %v952
    %v956 = vrsqrt.pop %v922
    %v957 = vmul.f32 %v922, %v956
    %vm958 = vcmp.eq.f32.partialorder %v922, inf
    %v959 = vsel %vm958, %v922, %v957
    %vm960 = vcmp.eq.f32.partialorder %v922, 0.0
    %v961 = vand.u32 %v922, 2147483648
    %v962 = vsel %vm960, %v961, %v959
    %v963 = vrsqrt.pop %v923
    %v964 = vmul.f32 %v923, %v963
    %vm965 = vcmp.eq.f32.partialorder %v923, inf
    %v966 = vsel %vm965, %v923, %v964
    %vm967 = vcmp.eq.f32.partialorder %v923, 0.0
    %v968 = vand.u32 %v923, 2147483648
    %v969 = vsel %vm967, %v968, %v966
    %v970 = vrsqrt.pop %v924
    %v971 = vmul.f32 %v924, %v970
    %vm972 = vcmp.eq.f32.partialorder %v924, inf
    %v973 = vsel %vm972, %v924, %v971
    %vm974 = vcmp.eq.f32.partialorder %v924, 0.0
    %v975 = vand.u32 %v924, 2147483648
    %v976 = vsel %vm974, %v975, %v973
    %v977 = vrsqrt.pop %v925
    %v978 = vmul.f32 %v925, %v977
    %vm979 = vcmp.eq.f32.partialorder %v925, inf
    %v980 = vsel %vm979, %v925, %v978
    %vm981 = vcmp.eq.f32.partialorder %v925, 0.0
    %v982 = vand.u32 %v925, 2147483648
    %v983 = vsel %vm981, %v982, %v980
    %v984 = vrsqrt.pop %v926
    %v985 = vmul.f32 %v926, %v984
    %vm986 = vcmp.eq.f32.partialorder %v926, inf
    %v987 = vsel %vm986, %v926, %v985
    %vm988 = vcmp.eq.f32.partialorder %v926, 0.0
    %v989 = vand.u32 %v926, 2147483648
    %v990 = vsel %vm988, %v989, %v987
    %v991 = vrsqrt.pop %v927
    %v992 = vmul.f32 %v927, %v991
    %vm993 = vcmp.eq.f32.partialorder %v927, inf
    %v994 = vsel %vm993, %v927, %v992
    %vm995 = vcmp.eq.f32.partialorder %v927, 0.0
    %v996 = vand.u32 %v927, 2147483648
    %v997 = vsel %vm995, %v996, %v994
    %v998 = vrsqrt.pop %v928
    %v999 = vmul.f32 %v928, %v998
    %vm1000 = vcmp.eq.f32.partialorder %v928, inf
    %v1001 = vsel %vm1000, %v928, %v999
    %vm1002 = vcmp.eq.f32.partialorder %v928, 0.0
    %v1003 = vand.u32 %v928, 2147483648
    %v1004 = vsel %vm1002, %v1003, %v1001
    %v1005 = vrsqrt.pop %v929
    %v1006 = vmul.f32 %v929, %v1005
    %vm1007 = vcmp.eq.f32.partialorder %v929, inf
    %v1008 = vsel %vm1007, %v929, %v1006
    %vm1009 = vcmp.eq.f32.partialorder %v929, 0.0
    %v1010 = vand.u32 %v929, 2147483648
    %v1011 = vsel %vm1009, %v1010, %v1008
    %v1012 = vrsqrt.pop %v930
    %v1013 = vmul.f32 %v930, %v1012
    %vm1014 = vcmp.eq.f32.partialorder %v930, inf
    %v1015 = vsel %vm1014, %v930, %v1013
    %vm1016 = vcmp.eq.f32.partialorder %v930, 0.0
    %v1017 = vand.u32 %v930, 2147483648
    %v1018 = vsel %vm1016, %v1017, %v1015
    %v1019 = vrsqrt.pop %v931
    %v1020 = vmul.f32 %v931, %v1019
    %vm1021 = vcmp.eq.f32.partialorder %v931, inf
    %v1022 = vsel %vm1021, %v931, %v1020
    %vm1023 = vcmp.eq.f32.partialorder %v931, 0.0
    %v1024 = vand.u32 %v931, 2147483648
    %v1025 = vsel %vm1023, %v1024, %v1022
    %v1026 = vrsqrt.pop %v932
    %v1027 = vmul.f32 %v932, %v1026
    %vm1028 = vcmp.eq.f32.partialorder %v932, inf
    %v1029 = vsel %vm1028, %v932, %v1027
    %vm1030 = vcmp.eq.f32.partialorder %v932, 0.0
    %v1031 = vand.u32 %v932, 2147483648
    %v1032 = vsel %vm1030, %v1031, %v1029
    %v1033 = vrsqrt.pop %v933
    %v1034 = vmul.f32 %v933, %v1033
    %vm1035 = vcmp.eq.f32.partialorder %v933, inf
    %v1036 = vsel %vm1035, %v933, %v1034
    %vm1037 = vcmp.eq.f32.partialorder %v933, 0.0
    %v1038 = vand.u32 %v933, 2147483648
    %v1039 = vsel %vm1037, %v1038, %v1036
    %v1040 = vrsqrt.pop %v934
    %v1041 = vmul.f32 %v934, %v1040
    %vm1042 = vcmp.eq.f32.partialorder %v934, inf
    %v1043 = vsel %vm1042, %v934, %v1041
    %vm1044 = vcmp.eq.f32.partialorder %v934, 0.0
    %v1045 = vand.u32 %v934, 2147483648
    %v1046 = vsel %vm1044, %v1045, %v1043
    %v1047 = vmul.f32 %v941, 0.70710677
    %v1048 = vmul.f32 %v948, 0.70710677
    %v1049 = vmul.f32 %v955, 0.70710677
    %v1050 = vmul.f32 %v962, 0.70710677
    %v1051 = vmul.f32 %v969, 0.70710677
    %v1052 = vmul.f32 %v976, 0.70710677
    %v1053 = vmul.f32 %v983, 0.70710677
    %v1054 = vmul.f32 %v990, 0.70710677
    %v1055 = vmul.f32 %v997, 0.70710677
    %v1056 = vmul.f32 %v1004, 0.70710677
    %v1057 = vmul.f32 %v1011, 0.70710677
    %v1058 = vmul.f32 %v1018, 0.70710677
    %v1059 = vmul.f32 %v1025, 0.70710677
    %v1060 = vmul.f32 %v1032, 0.70710677
    %v1061 = vmul.f32 %v1039, 0.70710677
    %v1062 = vmul.f32 %v1046, 0.70710677
    %v1063 = vld [vmem:[#allocation2] sm:$0xff]
    %v1064 = vld [vmem:[#allocation2 + $0x8] sm:$0xff]
    %v1065 = vld [vmem:[#allocation2 + $0x10] sm:$0xff]
    %v1066 = vld [vmem:[#allocation2 + $0x18] sm:$0xff]
    %v1067 = vld [vmem:[#allocation2 + $0x20] sm:$0xff]
    %v1068 = vld [vmem:[#allocation2 + $0x28] sm:$0xff]
    %v1069 = vld [vmem:[#allocation2 + $0x30] sm:$0xff]
    %v1070 = vld [vmem:[#allocation2 + $0x38] sm:$0xff]
    %v1071 = vld [vmem:[#allocation2 + $0x40] sm:$0xff]
    %v1072 = vld [vmem:[#allocation2 + $0x48] sm:$0xff]
    %v1073 = vld [vmem:[#allocation2 + $0x50] sm:$0xff]
    %v1074 = vld [vmem:[#allocation2 + $0x58] sm:$0xff]
    %v1075 = vld [vmem:[#allocation2 + $0x60] sm:$0xff]
    %v1076 = vld [vmem:[#allocation2 + $0x68] sm:$0xff]
    %v1077 = vld [vmem:[#allocation2 + $0x70] sm:$0xff]
    %v1078 = vld [vmem:[#allocation2 + $0x78] sm:$0xff]
    %v1079 = vmul.f32 %v1047, %v1063
    %v1080 = vmul.f32 %v1048, %v1064
    %v1081 = vmul.f32 %v1049, %v1065
    %v1082 = vmul.f32 %v1050, %v1066
    %v1083 = vmul.f32 %v1051, %v1067
    %v1084 = vmul.f32 %v1052, %v1068
    %v1085 = vmul.f32 %v1053, %v1069
    %v1086 = vmul.f32 %v1054, %v1070
    %v1087 = vmul.f32 %v1055, %v1071
    %v1088 = vmul.f32 %v1056, %v1072
    %v1089 = vmul.f32 %v1057, %v1073
    %v1090 = vmul.f32 %v1058, %v1074
    %v1091 = vmul.f32 %v1059, %v1075
    %v1092 = vmul.f32 %v1060, %v1076
    %v1093 = vmul.f32 %v1061, %v1077
    %v1094 = vmul.f32 %v1062, %v1078
    %v1095 = vadd.f32 %v662, %v1079
    %v1096 = vadd.f32 %v663, %v1080
    %v1097 = vadd.f32 %v664, %v1081
    %v1098 = vadd.f32 %v665, %v1082
    %v1099 = vadd.f32 %v666, %v1083
    %v1100 = vadd.f32 %v667, %v1084
    %v1101 = vadd.f32 %v668, %v1085
    %v1102 = vadd.f32 %v669, %v1086
    %v1103 = vadd.f32 %v670, %v1087
    %v1104 = vadd.f32 %v671, %v1088
    %v1105 = vadd.f32 %v672, %v1089
    %v1106 = vadd.f32 %v673, %v1090
    %v1107 = vadd.f32 %v674, %v1091
    %v1108 = vadd.f32 %v675, %v1092
    %v1109 = vadd.f32 %v676, %v1093
    %v1110 = vadd.f32 %v677, %v1094
    %v1111 = vmul.f32 %v871, 0.4082483
    %v1112 = vmul.f32 %v872, 0.4082483
    %v1113 = vmul.f32 %v873, 0.4082483
    %v1114 = vmul.f32 %v874, 0.4082483
    %v1115 = vmul.f32 %v875, 0.4082483
    %v1116 = vmul.f32 %v876, 0.4082483
    %v1117 = vmul.f32 %v877, 0.4082483
    %v1118 = vmul.f32 %v878, 0.4082483
    %v1119 = vmul.f32 %v879, 0.4082483
    %v1120 = vmul.f32 %v880, 0.4082483
    %v1121 = vmul.f32 %v881, 0.4082483
    %v1122 = vmul.f32 %v882, 0.4082483
    %v1123 = vmul.f32 %v883, 0.4082483
    %v1124 = vmul.f32 %v884, 0.4082483
    %v1125 = vmul.f32 %v885, 0.4082483
    %v1126 = vmul.f32 %v886, 0.4082483
    %v1127 = vadd.f32 %v1095, %v1111
    %v1128 = vadd.f32 %v1096, %v1112
    %v1129 = vadd.f32 %v1097, %v1113
    %v1130 = vadd.f32 %v1098, %v1114
    %v1131 = vadd.f32 %v1099, %v1115
    %v1132 = vadd.f32 %v1100, %v1116
    %v1133 = vadd.f32 %v1101, %v1117
    %v1134 = vadd.f32 %v1102, %v1118
    %v1135 = vadd.f32 %v1103, %v1119
    %v1136 = vadd.f32 %v1104, %v1120
    %v1137 = vadd.f32 %v1105, %v1121
    %v1138 = vadd.f32 %v1106, %v1122
    %v1139 = vadd.f32 %v1107, %v1123
    %v1140 = vadd.f32 %v1108, %v1124
    %v1141 = vadd.f32 %v1109, %v1125
    %v1142 = vadd.f32 %v1110, %v1126
    %1143 = vst [vmem:[%s4] sm:$0xff] %v1127
    %1144 = vst [vmem:[%s4 + $0x8] sm:$0xff] %v1128
    %1145 = vst [vmem:[%s4 + $0x10] sm:$0xff] %v1129
    %1146 = vst [vmem:[%s4 + $0x18] sm:$0xff] %v1130
    %1147 = vst [vmem:[%s4 + $0x20] sm:$0xff] %v1131
    %1148 = vst [vmem:[%s4 + $0x28] sm:$0xff] %v1132
    %1149 = vst [vmem:[%s4 + $0x30] sm:$0xff] %v1133
    %1150 = vst [vmem:[%s4 + $0x38] sm:$0xff] %v1134
    %1151 = vst [vmem:[%s4 + $0x40] sm:$0xff] %v1135
    %1152 = vst [vmem:[%s4 + $0x48] sm:$0xff] %v1136
    %1153 = vst [vmem:[%s4 + $0x50] sm:$0xff] %v1137
    %1154 = vst [vmem:[%s4 + $0x58] sm:$0xff] %v1138
    %1155 = vst [vmem:[%s4 + $0x60] sm:$0xff] %v1139
    %1156 = vst [vmem:[%s4 + $0x68] sm:$0xff] %v1140
    %1157 = vst [vmem:[%s4 + $0x70] sm:$0xff] %v1141
    %1158 = vst [vmem:[%s4 + $0x78] sm:$0xff] %v1142
    %v1159 = vld [vmem:[%s3] sm:$0xff]
    %1160 = vmatprep.subr.mxu0 0.0
    %1161 = vmatpush1.msra.mxu0 %v1127
    %1162 = vmatprep.subr.mxu0 0.0
    %1163 = vmatpush1.msra.mxu0 %v1128
    %1164 = vmatprep.subr.mxu0 0.0
    %1165 = vmatpush1.msra.mxu0 %v1129
    %1166 = vmatprep.subr.mxu0 0.0
    %1167 = vmatpush1.msra.mxu0 %v1130
    %1168 = vmatprep.subr.mxu0 0.0
    %1169 = vmatpush1.msra.mxu0 %v1131
    %1170 = vmatprep.subr.mxu0 0.0
    %1171 = vmatpush1.msra.mxu0 %v1132
    %1172 = vmatprep.subr.mxu0 0.0
    %1173 = vmatpush1.msra.mxu0 %v1133
    %1174 = vmatprep.subr.mxu0 0.0
    %1175 = vmatpush1.msra.mxu0 %v1134
    %1176 = vmatprep.subr.mxu0 0.0
    %1177 = vmatpush1.msra.mxu0 %v1135
    %1178 = vmatprep.subr.mxu0 0.0
    %1179 = vmatpush1.msra.mxu0 %v1136
    %1180 = vmatprep.subr.mxu0 0.0
    %1181 = vmatpush1.msra.mxu0 %v1137
    %1182 = vmatprep.subr.mxu0 0.0
    %1183 = vmatpush1.msra.mxu0 %v1138
    %1184 = vmatprep.subr.mxu0 0.0
    %1185 = vmatpush1.msra.mxu0 %v1139
    %1186 = vmatprep.subr.mxu0 0.0
    %1187 = vmatpush1.msra.mxu0 %v1140
    %1188 = vmatprep.subr.mxu0 0.0
    %1189 = vmatpush1.msra.mxu0 %v1141
    %1190 = vmatprep.subr.mxu0 0.0
    %1191 = vmatpush1.msra.mxu0 %v1142
    %1192 = vmatprep.subr.mxu0 0.0
    %1193 = vmatpush1.msra.mxu0 0.0
    %1194 = vmatprep.subr.mxu0 0.0
    %1195 = vmatpush1.msra.mxu0 0.0
    %1196 = vmatprep.subr.mxu0 0.0
    %1197 = vmatpush1.msra.mxu0 0.0
    %1198 = vmatprep.subr.mxu0 0.0
    %1199 = vmatpush1.msra.mxu0 0.0
    %1200 = vmatprep.subr.mxu0 0.0
    %1201 = vmatpush1.msra.mxu0 0.0
    %1202 = vmatprep.subr.mxu0 0.0
    %1203 = vmatpush1.msra.mxu0 0.0
    %1204 = vmatprep.subr.mxu0 0.0
    %1205 = vmatpush1.msra.mxu0 0.0
    %1206 = vmatprep.subr.mxu0 0.0
    %1207 = vmatpush1.msra.mxu0 0.0
    %1208 = vmatprep.subr.mxu0 0.0
    %1209 = vmatpush1.msra.mxu0 0.0
    %1210 = vmatprep.subr.mxu0 0.0
    %1211 = vmatpush1.msra.mxu0 0.0
    %1212 = vmatprep.subr.mxu0 0.0
    %1213 = vmatpush1.msra.mxu0 0.0
    %1214 = vmatprep.subr.mxu0 0.0
    %1215 = vmatpush1.msra.mxu0 0.0
    %1216 = vmatprep.subr.mxu0 0.0
    %1217 = vmatpush1.msra.mxu0 0.0
    %1218 = vmatprep.subr.mxu0 0.0
    %1219 = vmatpush1.msra.mxu0 0.0
    %1220 = vmatprep.subr.mxu0 0.0
    %1221 = vmatpush1.msra.mxu0 0.0
    %1222 = vmatprep.subr.mxu0 0.0
    %1223 = vmatpush1.msra.mxu0 0.0
    %1224 = vmatprep.mubr.f32.mxu0 0.0
    %1225 = vmatmul.mubr.f32.gmra.mrb[0].mxu0 %v1159
    %v1226 = vpop.f32.mrb[0].mxu0
    %v1227 = vadd.f32 0.0, %v1226
    %v1228 = vpop.f32.mrb[0].mxu0
    %1229 = vdwg.mxu0
    %1230 = vst [vmem:[%s5] sm:$0xff] %v1227
    // Predicated region
    $region22: #{swag_pipeline.1} parent=1 // pred_check
      _
    $region23: #{swag_pipeline.1} parent=1 // pred_check_branch
      %1232 = sbr.rel (0) target = $region25
    $region24: #{swag_pipeline.1} parent=1 // pred_region
      _
    $region25: #{swag_pipeline.1} parent=1 // pred_fallthru
      _
    // Predicated region
    $region26: #{swag_pipeline.1} parent=1 // pred_check
      _
    $region27: #{swag_pipeline.1} parent=1 // pred_check_branch
      %1234 = sbr.rel (0) target = $region29
    $region28: #{swag_pipeline.1} parent=1 // pred_region
      _
    $region29: #{swag_pipeline.1} parent=1 // pred_fallthru
      _
    // Predicated region
    $region30: #{swag_pipeline.1} parent=1 // pred_check
      _
    $region31: #{swag_pipeline.1} parent=1 // pred_check_branch
      %1236 = sbr.rel (0) target = $region33
    $region32: #{swag_pipeline.1} parent=1 // pred_region
      _
    $region33: #{swag_pipeline.1} parent=1 // pred_fallthru
      _
    // Predicated region
    $region34: #{swag_pipeline.1} parent=1 // pred_check
      _
    $region35: #{swag_pipeline.1} parent=1 // pred_check_branch
      %1238 = sbr.rel (0) target = $region37
    $region36: #{swag_pipeline.1} parent=1 // pred_region
      _
    $region37: #{swag_pipeline.1} parent=1 // pred_fallthru
      _
    %1239 = vsyncpa [#allocation3], 1

</llo_original>
